<compile_context>
chip_gen: v6e
topology: v6e:2x2x1
jax: 0.10.0
libtpu: 0.0.40
codegen_flags: <defaults>
</compile_context>

<pallas_src>
from functools import partial

import jax
import jax.numpy as jnp
from jax.experimental import pallas as pl
from jax.experimental.pallas import tpu as pltpu


def _round_up(x, m):
    return ((x + m - 1) // m) * m


# ----------------------------- Pallas kernel -----------------------------
def _conv_bn_mish_kernel(x_ref, w_ref, shift_ref, o_ref):
    # conv as GEMM on the MXU: bf16 inputs, f32 accumulation.
    y = jnp.dot(x_ref[...], w_ref[...], preferred_element_type=jnp.float32)
    # folded BatchNorm (inference): scale already folded into the weight,
    # only the per-channel shift is added here.
    y = y + shift_ref[...]
    # Mish(y) = y * tanh(softplus(y)) = y * (n - 1) / (n + 1),  n = (1 + e^y)^2
    # clamp at 20: for y > 20 the ratio is 1 within f32, and exp never overflows.
    e = jnp.exp(jnp.minimum(y, 20.0))
    n = (1.0 + e) * (1.0 + e)
    mish = y * (n - 1.0) * pl.reciprocal(n + 1.0, approx=True)
    o_ref[...] = mish.astype(o_ref.dtype)


def _matmul_bn_mish(patches, w, shift, cout, *, max_tm=512, tn=128):
    """patches: (M, K) bf16, w: (K, Cp) bf16 (BN scale folded, Cout zero-padded
    to Cp = multiple of 128), shift: (Cp,) f32.  Returns (M, cout) f32."""
    M, K = patches.shape
    Cp = w.shape[1]
    assert Cp % tn == 0

    # Big M tile (mem-bound regime), multiple of 16 for bf16 sublane packing.
    tm = min(max_tm, _round_up(M, 16))
    grid = (pl.cdiv(M, tm), Cp // tn)

    out = pl.pallas_call(
        _conv_bn_mish_kernel,
        out_shape=jax.ShapeDtypeStruct((M, Cp), jnp.float32),
        grid_spec=pltpu.PrefetchScalarGridSpec(
            num_scalar_prefetch=0,
            grid=grid,
            in_specs=[
                pl.BlockSpec((tm, K), lambda i, j: (i, 0)),   # patches tile
                pl.BlockSpec((K, tn), lambda i, j: (0, j)),   # weight tile
                pl.BlockSpec((1, tn), lambda i, j: (0, j)),   # shift tile
            ],
            out_specs=pl.BlockSpec((tm, tn), lambda i, j: (i, j)),
        ),
        compiler_params=pltpu.CompilerParams(
            dimension_semantics=("parallel", "parallel")),
    )(patches, w, shift.reshape(1, Cp))
    return out[:, :cout]


# ----------------------------- glue / wrapper -----------------------------
def init_route_params(key, in_channels, type=True):
    """Deterministic synthetic parameters matching Route_Module.__init__."""
    if type:
        cout, k = in_channels // 2, 1
    else:
        cout, k = in_channels * 2, 3
    k0, k1, k2, k3, k4 = jax.random.split(key, 5)
    return dict(
        weight=0.1 * jax.random.normal(k0, (cout, in_channels, k, k), jnp.float32),
        gamma=1.0 + 0.1 * jax.random.normal(k1, (cout,), jnp.float32),
        beta=0.1 * jax.random.normal(k2, (cout,), jnp.float32),
        running_mean=0.1 * jax.random.normal(k3, (cout,), jnp.float32),
        running_var=jnp.abs(jax.random.normal(k4, (cout,), jnp.float32)) + 0.5,
        eps=jnp.float32(1e-5),
    )


@partial(jax.jit, static_argnames=("type",))
def route_module_forward(x_nchw, params, type=True):
    """x_nchw: (N, Cin, H, W) float32 -> (N, Cout, Ho, Wo) float32."""
    w = params["weight"]
    cout, cin, kh, kw = w.shape
    n, _, h, wd = x_nchw.shape

    # fold BN into per-channel affine; scale goes into the weight.
    scale = params["gamma"] * jax.lax.rsqrt(params["running_var"] + params["eps"])
    shift = params["beta"] - params["running_mean"] * scale

    # NHWC, bf16 for the MXU-facing stream (halves HBM traffic of patches).
    x_nhwc = jnp.transpose(x_nchw, (0, 2, 3, 1)).astype(jnp.bfloat16)

    if type:
        # 1x1 conv, stride 1, no padding: patches are just the pixels.
        ho, wo = h, wd
        patches = x_nhwc.reshape(n * ho * wo, cin)
        wm = jnp.transpose(w.reshape(cout, cin), (1, 0))              # (Cin, Cout)
    else:
        # 3x3 conv, stride 2, padding 1.
        # TODO(synk): move this im2col in-kernel (halo-DMA'd NHWC input tiles +
        # 9 tap dots into a VMEM accumulator) to avoid the ~9x patches
        # round-trip through HBM; kept wrapper-side (in bf16) for now.
        stride, pad = 2, 1
        ho = (h + 2 * pad - kh) // stride + 1
        wo = (wd + 2 * pad - kw) // stride + 1
        xp = jnp.pad(x_nhwc, ((0, 0), (pad, pad), (pad, pad), (0, 0)))
        taps = []
        for i in range(kh):
            for j in range(kw):
                taps.append(xp[:, i:i + ho * stride:stride,
                               j:j + wo * stride:stride, :])          # (N,Ho,Wo,Cin)
        patches = jnp.concatenate(taps, axis=-1).reshape(n * ho * wo, kh * kw * cin)
        # weight reordered to (kh, kw, Cin, Cout) to match tap ordering above
        wm = jnp.transpose(w, (2, 3, 1, 0)).reshape(kh * kw * cin, cout)

    # fold BN scale into the weight; lane-densify Cout (pad to multiple of 128)
    wm = wm.astype(jnp.float32) * scale[None, :]
    cp = _round_up(cout, 128)
    if cp != cout:
        wm = jnp.pad(wm, ((0, 0), (0, cp - cout)))
        shift_p = jnp.pad(shift, (0, cp - cout))
    else:
        shift_p = shift
    wm = wm.astype(jnp.bfloat16)

    out = _matmul_bn_mish(patches, wm, shift_p.astype(jnp.float32), cout)
    out = out.reshape(n, ho, wo, cout).astype(x_nchw.dtype)
    return jnp.transpose(out, (0, 3, 1, 2))                           # back to NCHW


# pure-JAX reference for validation (f32 conv + BN + Mish)
def _reference(x_nchw, params, type=True):
    w = params["weight"]
    stride = 1 if type else 2
    pad = 0 if type else 1
    y = jax.lax.conv_general_dilated(
        x_nchw, w, (stride, stride), [(pad, pad), (pad, pad)],
        dimension_numbers=("NCHW", "OIHW", "NCHW"))
    scale = params["gamma"] / jnp.sqrt(params["running_var"] + params["eps"])
    shift = params["beta"] - params["running_mean"] * scale
    y = y * scale[None, :, None, None] + shift[None, :, None, None]
    return y * jnp.tanh(jnp.log1p(jnp.exp(y)))


if __name__ == "__main__":
    key = jax.random.PRNGKey(0)
    kx, kp1, kp2 = jax.random.split(key, 3)

    in_channels = 8
    x = jax.random.normal(kx, (2, in_channels, 16, 16), jnp.float32)

    # type=True branch: 1x1 conv, in -> in//2, stride 1
    params_t = init_route_params(kp1, in_channels, type=True)
    out_t = jax.block_until_ready(route_module_forward(x, params_t, type=True))
    ref_t = _reference(x, params_t, type=True)
    assert out_t.shape == (2, in_channels // 2, 16, 16)
    assert jnp.allclose(out_t, ref_t, rtol=2e-2, atol=2e-2), \
        float(jnp.max(jnp.abs(out_t - ref_t)))

    # type=False branch: 3x3 conv, in -> in*2, stride 2, padding 1
    params_f = init_route_params(kp2, in_channels, type=False)
    out_f = jax.block_until_ready(route_module_forward(x, params_f, type=False))
    ref_f = _reference(x, params_f, type=False)
    assert out_f.shape == (2, in_channels * 2, 8, 8)
    assert jnp.allclose(out_f, ref_f, rtol=2e-2, atol=2e-2), \
        float(jnp.max(jnp.abs(out_f - ref_f)))

    print("KERNEL_OK")
</pallas_src>

<mosaic_0001>
module attributes {stable_mosaic.version = 11 : i64} {
  func.func @_conv_bn_mish_kernel(%arg0: i32, %arg1: i32, %arg2: memref<512x8xbf16, #tpu.memory_space<vmem>>, %arg3: memref<8x128xbf16, #tpu.memory_space<vmem>>, %arg4: memref<1x128xf32, #tpu.memory_space<vmem>>, %arg5: memref<512x128xf32, #tpu.memory_space<vmem>>) attributes {dimension_semantics = [#tpu.dimension_semantics<parallel>, #tpu.dimension_semantics<parallel>], iteration_bounds = array<i64: 1, 1>, scalar_prefetch = 0 : i64, scratch_operands = 0 : i64, tpu.core_type = #tpu.core_type<tc>, window_params = [{transform_indices = @transform_0, window_bounds = array<i64: 512, 8>}, {transform_indices = @transform_1, window_bounds = array<i64: 8, 128>}, {transform_indices = @transform_2, window_bounds = array<i64: 1, 128>}, {transform_indices = @transform_3, window_bounds = array<i64: 512, 128>}]} {
    %c0 = arith.constant 0 : index
    %c0_0 = arith.constant 0 : index
    %0 = vector.load %arg2[%c0, %c0_0] : memref<512x8xbf16, #tpu.memory_space<vmem>>, vector<512x8xbf16>
    %c0_1 = arith.constant 0 : index
    %c0_2 = arith.constant 0 : index
    %1 = vector.load %arg3[%c0_1, %c0_2] : memref<8x128xbf16, #tpu.memory_space<vmem>>, vector<8x128xbf16>
    %cst = arith.constant dense<0.000000e+00> : vector<512x128xf32>
    %2 = tpu.matmul %0, %1, %cst {dimension_numbers = #tpu.dot_dimension_numbers<[1], [0], [0], [1], [0, 0, 1, 1], [], []>} : vector<512x8xbf16>, vector<8x128xbf16>, vector<512x128xf32> -> vector<512x128xf32>
    %c0_3 = arith.constant 0 : index
    %c0_4 = arith.constant 0 : index
    %3 = vector.load %arg4[%c0_3, %c0_4] : memref<1x128xf32, #tpu.memory_space<vmem>>, vector<1x128xf32>
    %4 = vector.broadcast %3 : vector<1x128xf32> to vector<512x128xf32>
    %5 = arith.addf %2, %4 : vector<512x128xf32>
    %cst_5 = arith.constant 2.000000e+01 : f32
    %6 = vector.broadcast %cst_5 : f32 to vector<512x128xf32>
    %7 = arith.minimumf %5, %6 : vector<512x128xf32>
    %8 = math.exp %7 : vector<512x128xf32>
    %cst_6 = arith.constant 1.000000e+00 : f32
    %9 = vector.broadcast %cst_6 : f32 to vector<512x128xf32>
    %10 = arith.addf %9, %8 : vector<512x128xf32>
    %cst_7 = arith.constant 1.000000e+00 : f32
    %11 = vector.broadcast %cst_7 : f32 to vector<512x128xf32>
    %12 = arith.addf %11, %8 : vector<512x128xf32>
    %13 = arith.mulf %10, %12 : vector<512x128xf32>
    %cst_8 = arith.constant 1.000000e+00 : f32
    %14 = vector.broadcast %cst_8 : f32 to vector<512x128xf32>
    %15 = arith.subf %13, %14 : vector<512x128xf32>
    %16 = arith.mulf %5, %15 : vector<512x128xf32>
    %cst_9 = arith.constant 1.000000e+00 : f32
    %17 = vector.broadcast %cst_9 : f32 to vector<512x128xf32>
    %18 = arith.addf %13, %17 : vector<512x128xf32>
    %19 = tpu.reciprocal %18 {approx = true} : vector<512x128xf32> -> vector<512x128xf32>
    %20 = arith.mulf %16, %19 : vector<512x128xf32>
    %c0_10 = arith.constant 0 : index
    %c0_11 = arith.constant 0 : index
    %21 = vector.load %arg5[%c0_10, %c0_11] : memref<512x128xf32, #tpu.memory_space<vmem>>, vector<512x128xf32>
    tpu.vector_store %arg5[%c0_10, %c0_11], %20 {strides = array<i32>} : memref<512x128xf32, #tpu.memory_space<vmem>>, vector<512x128xf32>,
    return
  }
  func.func @transform_0(%arg0: i32, %arg1: i32) -> (i32, i32) {
    %c0_i32 = arith.constant 0 : i32
    %c0_i32_0 = arith.constant 0 : i32
    return %arg0, %c0_i32 : i32, i32
  }
  func.func @transform_1(%arg0: i32, %arg1: i32) -> (i32, i32) {
    %c0_i32 = arith.constant 0 : i32
    %c0_i32_0 = arith.constant 0 : i32
    return %c0_i32, %arg1 : i32, i32
  }
  func.func @transform_2(%arg0: i32, %arg1: i32) -> (i32, i32) {
    %c0_i32 = arith.constant 0 : i32
    %c0_i32_0 = arith.constant 0 : i32
    return %c0_i32, %arg1 : i32, i32
  }
  func.func @transform_3(%arg0: i32, %arg1: i32) -> (i32, i32) {
    %c0_i32 = arith.constant 0 : i32
    return %arg0, %arg1 : i32, i32
  }
}

</mosaic_0001>

<llo_original>
// kernel: route_module_forward.1
$region0: #{route_module_forward.1}
  #allocation0 [shape = 'u32[]', space=smem, size = 0x4, offset = 0x4, fixed_abs, tag = 'smem constant byte address 0x4 - core index']
  #allocation1 [shape = 'u32[144,128]{1,0:T(1,128)}', space=vmem, size = 0x12000, scoped, tag = 'internal scratch']
  %s0 = inlined_call_operand.vmem [shape: bf16[512,8], index: 0, kind: input, shape index: {}]
  %s1 = inlined_call_operand.vmem [shape: bf16[8,128], index: 1, kind: input, shape index: {}]
  %s2 = inlined_call_operand.vmem [shape: f32[1,128], index: 2, kind: input, shape index: {}]
  %s3 = inlined_call_operand.vmem [shape: f32[512,128], index: 3, kind: output, shape index: {}]
  %s4 = sld [smem:[#allocation0]]
  $region22: #{route_module_forward.1} parent=0
    _
  %s6 = ssub.s32 1, %s4
  %s7 = scalar_select 0, %s6, %s4
  // Predicated region
  $region2: #{route_module_forward.1} parent=0 // pred_check
    _
  $region3: #{route_module_forward.1} parent=0 // pred_check_branch
    %9 = sbr.rel (0) target = $region5
  $region4: #{route_module_forward.1} parent=0 // pred_region
    _
  $region5: #{route_module_forward.1} parent=0 // pred_fallthru
    _
  // Predicated region
  $region6: #{route_module_forward.1} parent=0 // pred_check
    _
  $region7: #{route_module_forward.1} parent=0 // pred_check_branch
    %11 = sbr.rel (0) target = $region9
  $region8: #{route_module_forward.1} parent=0 // pred_region
    _
  $region9: #{route_module_forward.1} parent=0 // pred_fallthru
    _
  // Predicated region
  $region10: #{route_module_forward.1} parent=0 // pred_check
    _
  $region11: #{route_module_forward.1} parent=0 // pred_check_branch
    %13 = sbr.rel (0) target = $region13
  $region12: #{route_module_forward.1} parent=0 // pred_region
    _
  $region13: #{route_module_forward.1} parent=0 // pred_fallthru
    _
  %v15 = vld [vmem:[%s0] sm:$0xf]
  %v16 = vld [vmem:[%s0 + $0x4] sm:$0xf]
  %v17 = vld [vmem:[%s0 + $0x8] sm:$0xf]
  %v18 = vld [vmem:[%s0 + $0xc] sm:$0xf]
  %v19 = vld [vmem:[%s0 + $0x10] sm:$0xf]
  %v20 = vld [vmem:[%s0 + $0x14] sm:$0xf]
  %v21 = vld [vmem:[%s0 + $0x18] sm:$0xf]
  %v22 = vld [vmem:[%s0 + $0x1c] sm:$0xf]
  %v23 = vld [vmem:[%s0 + $0x20] sm:$0xf]
  %v24 = vld [vmem:[%s0 + $0x24] sm:$0xf]
  %v25 = vld [vmem:[%s0 + $0x28] sm:$0xf]
  %v26 = vld [vmem:[%s0 + $0x2c] sm:$0xf]
  %v27 = vld [vmem:[%s0 + $0x30] sm:$0xf]
  %v28 = vld [vmem:[%s0 + $0x34] sm:$0xf]
  %v29 = vld [vmem:[%s0 + $0x38] sm:$0xf]
  %v30 = vld [vmem:[%s0 + $0x3c] sm:$0xf]
  %v31 = vld [vmem:[%s0 + $0x40] sm:$0xf]
  %v32 = vld [vmem:[%s0 + $0x44] sm:$0xf]
  %v33 = vld [vmem:[%s0 + $0x48] sm:$0xf]
  %v34 = vld [vmem:[%s0 + $0x4c] sm:$0xf]
  %v35 = vld [vmem:[%s0 + $0x50] sm:$0xf]
  %v36 = vld [vmem:[%s0 + $0x54] sm:$0xf]
  %v37 = vld [vmem:[%s0 + $0x58] sm:$0xf]
  %v38 = vld [vmem:[%s0 + $0x5c] sm:$0xf]
  %v39 = vld [vmem:[%s0 + $0x60] sm:$0xf]
  %v40 = vld [vmem:[%s0 + $0x64] sm:$0xf]
  %v41 = vld [vmem:[%s0 + $0x68] sm:$0xf]
  %v42 = vld [vmem:[%s0 + $0x6c] sm:$0xf]
  %v43 = vld [vmem:[%s0 + $0x70] sm:$0xf]
  %v44 = vld [vmem:[%s0 + $0x74] sm:$0xf]
  %v45 = vld [vmem:[%s0 + $0x78] sm:$0xf]
  %v46 = vld [vmem:[%s0 + $0x7c] sm:$0xf]
  %v47 = vld [vmem:[%s0 + $0x80] sm:$0xf]
  %v48 = vld [vmem:[%s0 + $0x84] sm:$0xf]
  %v49 = vld [vmem:[%s0 + $0x88] sm:$0xf]
  %v50 = vld [vmem:[%s0 + $0x8c] sm:$0xf]
  %v51 = vld [vmem:[%s0 + $0x90] sm:$0xf]
  %v52 = vld [vmem:[%s0 + $0x94] sm:$0xf]
  %v53 = vld [vmem:[%s0 + $0x98] sm:$0xf]
  %v54 = vld [vmem:[%s0 + $0x9c] sm:$0xf]
  %v55 = vld [vmem:[%s0 + $0xa0] sm:$0xf]
  %v56 = vld [vmem:[%s0 + $0xa4] sm:$0xf]
  %v57 = vld [vmem:[%s0 + $0xa8] sm:$0xf]
  %v58 = vld [vmem:[%s0 + $0xac] sm:$0xf]
  %v59 = vld [vmem:[%s0 + $0xb0] sm:$0xf]
  %v60 = vld [vmem:[%s0 + $0xb4] sm:$0xf]
  %v61 = vld [vmem:[%s0 + $0xb8] sm:$0xf]
  %v62 = vld [vmem:[%s0 + $0xbc] sm:$0xf]
  %v63 = vld [vmem:[%s0 + $0xc0] sm:$0xf]
  %v64 = vld [vmem:[%s0 + $0xc4] sm:$0xf]
  %v65 = vld [vmem:[%s0 + $0xc8] sm:$0xf]
  %v66 = vld [vmem:[%s0 + $0xcc] sm:$0xf]
  %v67 = vld [vmem:[%s0 + $0xd0] sm:$0xf]
  %v68 = vld [vmem:[%s0 + $0xd4] sm:$0xf]
  %v69 = vld [vmem:[%s0 + $0xd8] sm:$0xf]
  %v70 = vld [vmem:[%s0 + $0xdc] sm:$0xf]
  %v71 = vld [vmem:[%s0 + $0xe0] sm:$0xf]
  %v72 = vld [vmem:[%s0 + $0xe4] sm:$0xf]
  %v73 = vld [vmem:[%s0 + $0xe8] sm:$0xf]
  %v74 = vld [vmem:[%s0 + $0xec] sm:$0xf]
  %v75 = vld [vmem:[%s0 + $0xf0] sm:$0xf]
  %v76 = vld [vmem:[%s0 + $0xf4] sm:$0xf]
  %v77 = vld [vmem:[%s0 + $0xf8] sm:$0xf]
  %v78 = vld [vmem:[%s0 + $0xfc] sm:$0xf]
  %v79 = vld [vmem:[%s1] sm:$0xf]
  %v80 = vld [vmem:[%s2] sm:$0x1]
  %v82 = vlaneseq
  %v83 = vshrl.u32 %v82, 7
  %v84 = vsub.s32 0, %v83
  %v85 = vrot.slane %v80, %v84
  %v151 = vunpack.c.l.b16 %v15
  %v152 = vunpack.c.l.b16 %v16
  %v153 = vunpack.c.l.b16 %v17
  %v154 = vunpack.c.l.b16 %v18
  %v155 = vunpack.c.l.b16 %v19
  %v156 = vunpack.c.l.b16 %v20
  %v157 = vunpack.c.l.b16 %v21
  %v158 = vunpack.c.l.b16 %v22
  %v159 = vunpack.c.l.b16 %v23
  %v160 = vunpack.c.l.b16 %v24
  %v161 = vunpack.c.l.b16 %v25
  %v162 = vunpack.c.l.b16 %v26
  %v163 = vunpack.c.l.b16 %v27
  %v164 = vunpack.c.l.b16 %v28
  %v165 = vunpack.c.l.b16 %v29
  %v166 = vunpack.c.l.b16 %v30
  %v167 = vunpack.c.l.b16 %v31
  %v168 = vunpack.c.l.b16 %v32
  %v169 = vunpack.c.l.b16 %v33
  %v170 = vunpack.c.l.b16 %v34
  %v171 = vunpack.c.l.b16 %v35
  %v172 = vunpack.c.l.b16 %v36
  %v173 = vunpack.c.l.b16 %v37
  %v174 = vunpack.c.l.b16 %v38
  %v175 = vunpack.c.l.b16 %v39
  %v176 = vunpack.c.l.b16 %v40
  %v177 = vunpack.c.l.b16 %v41
  %v178 = vunpack.c.l.b16 %v42
  %v179 = vunpack.c.l.b16 %v43
  %v180 = vunpack.c.l.b16 %v44
  %v181 = vunpack.c.l.b16 %v45
  %v182 = vunpack.c.l.b16 %v46
  %v183 = vunpack.c.l.b16 %v47
  %v184 = vunpack.c.l.b16 %v48
  %v185 = vunpack.c.l.b16 %v49
  %v186 = vunpack.c.l.b16 %v50
  %v187 = vunpack.c.l.b16 %v51
  %v188 = vunpack.c.l.b16 %v52
  %v189 = vunpack.c.l.b16 %v53
  %v190 = vunpack.c.l.b16 %v54
  %v191 = vunpack.c.l.b16 %v55
  %v192 = vunpack.c.l.b16 %v56
  %v193 = vunpack.c.l.b16 %v57
  %v194 = vunpack.c.l.b16 %v58
  %v195 = vunpack.c.l.b16 %v59
  %v196 = vunpack.c.l.b16 %v60
  %v197 = vunpack.c.l.b16 %v61
  %v198 = vunpack.c.l.b16 %v62
  %v199 = vunpack.c.l.b16 %v63
  %v200 = vunpack.c.l.b16 %v64
  %v201 = vunpack.c.l.b16 %v65
  %v202 = vunpack.c.l.b16 %v66
  %v203 = vunpack.c.l.b16 %v67
  %v204 = vunpack.c.l.b16 %v68
  %v205 = vunpack.c.l.b16 %v69
  %v206 = vunpack.c.l.b16 %v70
  %v207 = vunpack.c.l.b16 %v71
  %v208 = vunpack.c.l.b16 %v72
  %v209 = vunpack.c.l.b16 %v73
  %v210 = vunpack.c.l.b16 %v74
  %v211 = vunpack.c.l.b16 %v75
  %v212 = vunpack.c.l.b16 %v76
  %v213 = vunpack.c.l.b16 %v77
  %v214 = vunpack.c.l.b16 %v78
  %v215 = vpack.c.b16 %v152, %v151
  %v216 = vpack.c.b16 %v154, %v153
  %v217 = vpack.c.b16 %v156, %v155
  %v218 = vpack.c.b16 %v158, %v157
  %v219 = vpack.c.b16 %v160, %v159
  %v220 = vpack.c.b16 %v162, %v161
  %v221 = vpack.c.b16 %v164, %v163
  %v222 = vpack.c.b16 %v166, %v165
  %v223 = vpack.c.b16 %v168, %v167
  %v224 = vpack.c.b16 %v170, %v169
  %v225 = vpack.c.b16 %v172, %v171
  %v226 = vpack.c.b16 %v174, %v173
  %v227 = vpack.c.b16 %v176, %v175
  %v228 = vpack.c.b16 %v178, %v177
  %v229 = vpack.c.b16 %v180, %v179
  %v230 = vpack.c.b16 %v182, %v181
  %v231 = vpack.c.b16 %v184, %v183
  %v232 = vpack.c.b16 %v186, %v185
  %v233 = vpack.c.b16 %v188, %v187
  %v234 = vpack.c.b16 %v190, %v189
  %v235 = vpack.c.b16 %v192, %v191
  %v236 = vpack.c.b16 %v194, %v193
  %v237 = vpack.c.b16 %v196, %v195
  %v238 = vpack.c.b16 %v198, %v197
  %v239 = vpack.c.b16 %v200, %v199
  %v240 = vpack.c.b16 %v202, %v201
  %v241 = vpack.c.b16 %v204, %v203
  %v242 = vpack.c.b16 %v206, %v205
  %v243 = vpack.c.b16 %v208, %v207
  %v244 = vpack.c.b16 %v210, %v209
  %v245 = vpack.c.b16 %v212, %v211
  %v246 = vpack.c.b16 %v214, %v213
  %vm247 = vcmask 64512
  %v249 = vsel %vm247, %v215, 0
  %v252 = vsel %vm247, %v216, 0
  %v255 = vsel %vm247, %v217, 0
  %v258 = vsel %vm247, %v218, 0
  %v261 = vsel %vm247, %v219, 0
  %v264 = vsel %vm247, %v220, 0
  %v267 = vsel %vm247, %v221, 0
  %v270 = vsel %vm247, %v222, 0
  %v273 = vsel %vm247, %v223, 0
  %v276 = vsel %vm247, %v224, 0
  %v279 = vsel %vm247, %v225, 0
  %v282 = vsel %vm247, %v226, 0
  %v285 = vsel %vm247, %v227, 0
  %v288 = vsel %vm247, %v228, 0
  %v291 = vsel %vm247, %v229, 0
  %v294 = vsel %vm247, %v230, 0
  %v297 = vsel %vm247, %v231, 0
  %v300 = vsel %vm247, %v232, 0
  %v303 = vsel %vm247, %v233, 0
  %v306 = vsel %vm247, %v234, 0
  %v309 = vsel %vm247, %v235, 0
  %v312 = vsel %vm247, %v236, 0
  %v315 = vsel %vm247, %v237, 0
  %v318 = vsel %vm247, %v238, 0
  %v321 = vsel %vm247, %v239, 0
  %v324 = vsel %vm247, %v240, 0
  %v327 = vsel %vm247, %v241, 0
  %v330 = vsel %vm247, %v242, 0
  %v333 = vsel %vm247, %v243, 0
  %v336 = vsel %vm247, %v244, 0
  %v339 = vsel %vm247, %v245, 0
  %v342 = vsel %vm247, %v246, 0
  %vm344 = vcmask 1043456
  %v346 = vsel %vm344, %v79, 0
  %348 = vmatprep.subr.bf16.mxu0 0
  %349 = vmatpush1.bf16.msra.mxu0 0
  %350 = vmatprep.subr.bf16.mxu0 0
  %351 = vmatpush1.bf16.msra.mxu0 0
  %352 = vmatprep.subr.bf16.mxu0 0
  %353 = vmatpush1.bf16.msra.mxu0 0
  %354 = vmatprep.subr.bf16.mxu0 0
  %355 = vmatpush1.bf16.msra.mxu0 0
  %356 = vmatprep.subr.bf16.mxu0 0
  %357 = vmatpush1.bf16.msra.mxu0 0
  %358 = vmatprep.subr.bf16.mxu0 0
  %359 = vmatpush1.bf16.msra.mxu0 0
  %360 = vmatprep.subr.bf16.mxu0 0
  %361 = vmatpush1.bf16.msra.mxu0 0
  %362 = vmatprep.subr.bf16.mxu0 0
  %363 = vmatpush1.bf16.msra.mxu0 %v346
  %364 = vmatprep.subr.bf16.mxu0 0
  %365 = vmatpush2.bf16.msra.mxu0 0
  %366 = vmatprep.subr.bf16.mxu0 0
  %367 = vmatpush2.bf16.msra.mxu0 0
  %368 = vmatprep.subr.bf16.mxu0 0
  %369 = vmatpush2.bf16.msra.mxu0 0
  %370 = vmatprep.subr.bf16.mxu0 0
  %371 = vmatpush2.bf16.msra.mxu0 0
  %372 = vmatprep.subr.bf16.mxu0 0
  %373 = vmatpush2.bf16.msra.mxu0 0
  %374 = vmatprep.subr.bf16.mxu0 0
  %375 = vmatpush2.bf16.msra.mxu0 0
  %376 = vmatprep.subr.bf16.mxu0 0
  %377 = vmatpush2.bf16.msra.mxu0 0
  %378 = vmatprep.subr.bf16.mxu0 0
  %379 = vmatpush2.bf16.msra.mxu0 0
  %380 = vmatprep.mubr.bf16.mxu0 0
  %381 = vmatmul.mubr.bf16.gmra.mxu0 %v249
  %v382 = vpop.f32.mrf.mxu0
  %v383 = vadd.f32 %v85, %v382
  %v384 = vpop.f32.mrf.mxu0
  %v385 = vpop.f32.mrf.mxu0
  %v386 = vadd.f32 %v85, %v385
  %v387 = vpop.f32.mrf.mxu0
  %388 = vmatprep.mubr.bf16.mxu0 0
  %389 = vmatmul.mubr.bf16.gmra.mxu0 %v252
  %v390 = vpop.f32.mrf.mxu0
  %v391 = vadd.f32 %v85, %v390
  %v392 = vpop.f32.mrf.mxu0
  %v393 = vpop.f32.mrf.mxu0
  %v394 = vadd.f32 %v85, %v393
  %v395 = vpop.f32.mrf.mxu0
  %396 = vmatprep.mubr.bf16.mxu0 0
  %397 = vmatmul.mubr.bf16.gmra.mxu0 %v255
  %v398 = vpop.f32.mrf.mxu0
  %v399 = vadd.f32 %v85, %v398
  %v400 = vpop.f32.mrf.mxu0
  %v401 = vpop.f32.mrf.mxu0
  %v402 = vadd.f32 %v85, %v401
  %v403 = vpop.f32.mrf.mxu0
  %404 = vmatprep.mubr.bf16.mxu0 0
  %405 = vmatmul.mubr.bf16.gmra.mxu0 %v258
  %v406 = vpop.f32.mrf.mxu0
  %v407 = vadd.f32 %v85, %v406
  %v408 = vpop.f32.mrf.mxu0
  %v409 = vpop.f32.mrf.mxu0
  %v410 = vadd.f32 %v85, %v409
  %v411 = vpop.f32.mrf.mxu0
  %412 = vmatprep.mubr.bf16.mxu0 0
  %413 = vmatmul.mubr.bf16.gmra.mxu0 %v261
  %v414 = vpop.f32.mrf.mxu0
  %v415 = vadd.f32 %v85, %v414
  %v416 = vpop.f32.mrf.mxu0
  %v417 = vpop.f32.mrf.mxu0
  %v418 = vadd.f32 %v85, %v417
  %v419 = vpop.f32.mrf.mxu0
  %420 = vmatprep.mubr.bf16.mxu0 0
  %421 = vmatmul.mubr.bf16.gmra.mxu0 %v264
  %v422 = vpop.f32.mrf.mxu0
  %v423 = vadd.f32 %v85, %v422
  %v424 = vpop.f32.mrf.mxu0
  %v425 = vpop.f32.mrf.mxu0
  %v426 = vadd.f32 %v85, %v425
  %v427 = vpop.f32.mrf.mxu0
  %428 = vmatprep.mubr.bf16.mxu0 0
  %429 = vmatmul.mubr.bf16.gmra.mxu0 %v267
  %v430 = vpop.f32.mrf.mxu0
  %v431 = vadd.f32 %v85, %v430
  %v432 = vpop.f32.mrf.mxu0
  %v433 = vpop.f32.mrf.mxu0
  %v434 = vadd.f32 %v85, %v433
  %v435 = vpop.f32.mrf.mxu0
  %436 = vmatprep.mubr.bf16.mxu0 0
  %437 = vmatmul.mubr.bf16.gmra.mxu0 %v270
  %v438 = vpop.f32.mrf.mxu0
  %v439 = vadd.f32 %v85, %v438
  %v440 = vpop.f32.mrf.mxu0
  %v441 = vpop.f32.mrf.mxu0
  %v442 = vadd.f32 %v85, %v441
  %v443 = vpop.f32.mrf.mxu0
  %444 = vmatprep.mubr.bf16.mxu0 0
  %445 = vmatmul.mubr.bf16.gmra.mxu0 %v273
  %v446 = vpop.f32.mrf.mxu0
  %v447 = vadd.f32 %v85, %v446
  %v448 = vpop.f32.mrf.mxu0
  %v449 = vpop.f32.mrf.mxu0
  %v450 = vadd.f32 %v85, %v449
  %v451 = vpop.f32.mrf.mxu0
  %452 = vmatprep.mubr.bf16.mxu0 0
  %453 = vmatmul.mubr.bf16.gmra.mxu0 %v276
  %v454 = vpop.f32.mrf.mxu0
  %v455 = vadd.f32 %v85, %v454
  %v456 = vpop.f32.mrf.mxu0
  %v457 = vpop.f32.mrf.mxu0
  %v458 = vadd.f32 %v85, %v457
  %v459 = vpop.f32.mrf.mxu0
  %460 = vmatprep.mubr.bf16.mxu0 0
  %461 = vmatmul.mubr.bf16.gmra.mxu0 %v279
  %v462 = vpop.f32.mrf.mxu0
  %v463 = vadd.f32 %v85, %v462
  %v464 = vpop.f32.mrf.mxu0
  %v465 = vpop.f32.mrf.mxu0
  %v466 = vadd.f32 %v85, %v465
  %v467 = vpop.f32.mrf.mxu0
  %468 = vmatprep.mubr.bf16.mxu0 0
  %469 = vmatmul.mubr.bf16.gmra.mxu0 %v282
  %v470 = vpop.f32.mrf.mxu0
  %v471 = vadd.f32 %v85, %v470
  %v472 = vpop.f32.mrf.mxu0
  %v473 = vpop.f32.mrf.mxu0
  %v474 = vadd.f32 %v85, %v473
  %v475 = vpop.f32.mrf.mxu0
  %476 = vmatprep.mubr.bf16.mxu0 0
  %477 = vmatmul.mubr.bf16.gmra.mxu0 %v285
  %v478 = vpop.f32.mrf.mxu0
  %v479 = vadd.f32 %v85, %v478
  %v480 = vpop.f32.mrf.mxu0
  %v481 = vpop.f32.mrf.mxu0
  %v482 = vadd.f32 %v85, %v481
  %v483 = vpop.f32.mrf.mxu0
  %484 = vmatprep.mubr.bf16.mxu0 0
  %485 = vmatmul.mubr.bf16.gmra.mxu0 %v288
  %v486 = vpop.f32.mrf.mxu0
  %v487 = vadd.f32 %v85, %v486
  %v488 = vpop.f32.mrf.mxu0
  %v489 = vpop.f32.mrf.mxu0
  %v490 = vadd.f32 %v85, %v489
  %v491 = vpop.f32.mrf.mxu0
  %492 = vmatprep.mubr.bf16.mxu0 0
  %493 = vmatmul.mubr.bf16.gmra.mxu0 %v291
  %v494 = vpop.f32.mrf.mxu0
  %v495 = vadd.f32 %v85, %v494
  %v496 = vpop.f32.mrf.mxu0
  %v497 = vpop.f32.mrf.mxu0
  %v498 = vadd.f32 %v85, %v497
  %v499 = vpop.f32.mrf.mxu0
  %500 = vmatprep.mubr.bf16.mxu0 0
  %501 = vmatmul.mubr.bf16.gmra.mxu0 %v294
  %v502 = vpop.f32.mrf.mxu0
  %v503 = vadd.f32 %v85, %v502
  %v504 = vpop.f32.mrf.mxu0
  %v505 = vpop.f32.mrf.mxu0
  %v506 = vadd.f32 %v85, %v505
  %v507 = vpop.f32.mrf.mxu0
  %508 = vmatprep.mubr.bf16.mxu0 0
  %509 = vmatmul.mubr.bf16.gmra.mxu0 %v297
  %v510 = vpop.f32.mrf.mxu0
  %v511 = vadd.f32 %v85, %v510
  %v512 = vpop.f32.mrf.mxu0
  %v513 = vpop.f32.mrf.mxu0
  %v514 = vadd.f32 %v85, %v513
  %v515 = vpop.f32.mrf.mxu0
  %516 = vmatprep.mubr.bf16.mxu0 0
  %517 = vmatmul.mubr.bf16.gmra.mxu0 %v300
  %v518 = vpop.f32.mrf.mxu0
  %v519 = vadd.f32 %v85, %v518
  %v520 = vpop.f32.mrf.mxu0
  %v521 = vpop.f32.mrf.mxu0
  %v522 = vadd.f32 %v85, %v521
  %v523 = vpop.f32.mrf.mxu0
  %524 = vmatprep.mubr.bf16.mxu0 0
  %525 = vmatmul.mubr.bf16.gmra.mxu0 %v303
  %v526 = vpop.f32.mrf.mxu0
  %v527 = vadd.f32 %v85, %v526
  %v528 = vpop.f32.mrf.mxu0
  %v529 = vpop.f32.mrf.mxu0
  %v530 = vadd.f32 %v85, %v529
  %v531 = vpop.f32.mrf.mxu0
  %532 = vmatprep.mubr.bf16.mxu0 0
  %533 = vmatmul.mubr.bf16.gmra.mxu0 %v306
  %v534 = vpop.f32.mrf.mxu0
  %v535 = vadd.f32 %v85, %v534
  %v536 = vpop.f32.mrf.mxu0
  %v537 = vpop.f32.mrf.mxu0
  %v538 = vadd.f32 %v85, %v537
  %v539 = vpop.f32.mrf.mxu0
  %540 = vmatprep.mubr.bf16.mxu0 0
  %541 = vmatmul.mubr.bf16.gmra.mxu0 %v309
  %v542 = vpop.f32.mrf.mxu0
  %v543 = vadd.f32 %v85, %v542
  %v544 = vpop.f32.mrf.mxu0
  %v545 = vpop.f32.mrf.mxu0
  %v546 = vadd.f32 %v85, %v545
  %v547 = vpop.f32.mrf.mxu0
  %548 = vmatprep.mubr.bf16.mxu0 0
  %549 = vmatmul.mubr.bf16.gmra.mxu0 %v312
  %v550 = vpop.f32.mrf.mxu0
  %v551 = vadd.f32 %v85, %v550
  %v552 = vpop.f32.mrf.mxu0
  %v553 = vpop.f32.mrf.mxu0
  %v554 = vadd.f32 %v85, %v553
  %v555 = vpop.f32.mrf.mxu0
  %556 = vmatprep.mubr.bf16.mxu0 0
  %557 = vmatmul.mubr.bf16.gmra.mxu0 %v315
  %v558 = vpop.f32.mrf.mxu0
  %v559 = vadd.f32 %v85, %v558
  %v560 = vpop.f32.mrf.mxu0
  %v561 = vpop.f32.mrf.mxu0
  %v562 = vadd.f32 %v85, %v561
  %v563 = vpop.f32.mrf.mxu0
  %564 = vmatprep.mubr.bf16.mxu0 0
  %565 = vmatmul.mubr.bf16.gmra.mxu0 %v318
  %v566 = vpop.f32.mrf.mxu0
  %v567 = vadd.f32 %v85, %v566
  %v568 = vpop.f32.mrf.mxu0
  %v569 = vpop.f32.mrf.mxu0
  %v570 = vadd.f32 %v85, %v569
  %v571 = vpop.f32.mrf.mxu0
  %572 = vmatprep.mubr.bf16.mxu0 0
  %573 = vmatmul.mubr.bf16.gmra.mxu0 %v321
  %v574 = vpop.f32.mrf.mxu0
  %v575 = vadd.f32 %v85, %v574
  %v576 = vpop.f32.mrf.mxu0
  %v577 = vpop.f32.mrf.mxu0
  %v578 = vadd.f32 %v85, %v577
  %v579 = vpop.f32.mrf.mxu0
  %580 = vmatprep.mubr.bf16.mxu0 0
  %581 = vmatmul.mubr.bf16.gmra.mxu0 %v324
  %v582 = vpop.f32.mrf.mxu0
  %v583 = vadd.f32 %v85, %v582
  %v584 = vpop.f32.mrf.mxu0
  %v585 = vpop.f32.mrf.mxu0
  %v586 = vadd.f32 %v85, %v585
  %v587 = vpop.f32.mrf.mxu0
  %588 = vmatprep.mubr.bf16.mxu0 0
  %589 = vmatmul.mubr.bf16.gmra.mxu0 %v327
  %v590 = vpop.f32.mrf.mxu0
  %v591 = vadd.f32 %v85, %v590
  %v592 = vpop.f32.mrf.mxu0
  %v593 = vpop.f32.mrf.mxu0
  %v594 = vadd.f32 %v85, %v593
  %v595 = vpop.f32.mrf.mxu0
  %596 = vmatprep.mubr.bf16.mxu0 0
  %597 = vmatmul.mubr.bf16.gmra.mxu0 %v330
  %v598 = vpop.f32.mrf.mxu0
  %v599 = vadd.f32 %v85, %v598
  %v600 = vpop.f32.mrf.mxu0
  %v601 = vpop.f32.mrf.mxu0
  %v602 = vadd.f32 %v85, %v601
  %v603 = vpop.f32.mrf.mxu0
  %604 = vmatprep.mubr.bf16.mxu0 0
  %605 = vmatmul.mubr.bf16.gmra.mxu0 %v333
  %v606 = vpop.f32.mrf.mxu0
  %v607 = vadd.f32 %v85, %v606
  %v608 = vpop.f32.mrf.mxu0
  %v609 = vpop.f32.mrf.mxu0
  %v610 = vadd.f32 %v85, %v609
  %v611 = vpop.f32.mrf.mxu0
  %612 = vmatprep.mubr.bf16.mxu0 0
  %613 = vmatmul.mubr.bf16.gmra.mxu0 %v336
  %v614 = vpop.f32.mrf.mxu0
  %v615 = vadd.f32 %v85, %v614
  %v616 = vpop.f32.mrf.mxu0
  %v617 = vpop.f32.mrf.mxu0
  %v618 = vadd.f32 %v85, %v617
  %v619 = vpop.f32.mrf.mxu0
  %620 = vmatprep.mubr.bf16.mxu0 0
  %621 = vmatmul.mubr.bf16.gmra.mxu0 %v339
  %v622 = vpop.f32.mrf.mxu0
  %v623 = vadd.f32 %v85, %v622
  %v624 = vpop.f32.mrf.mxu0
  %v625 = vpop.f32.mrf.mxu0
  %v626 = vadd.f32 %v85, %v625
  %v627 = vpop.f32.mrf.mxu0
  %628 = vmatprep.mubr.bf16.mxu0 0
  %629 = vmatmul.mubr.bf16.gmra.mxu0 %v342
  %v630 = vpop.f32.mrf.mxu0
  %v631 = vadd.f32 %v85, %v630
  %v632 = vpop.f32.mrf.mxu0
  %v633 = vpop.f32.mrf.mxu0
  %v634 = vadd.f32 %v85, %v633
  %v635 = vpop.f32.mrf.mxu0
  %636 = vdwg.mxu0
  %v637 = vmin.f32 %v383, 20.0
  %v638 = vmin.f32 %v386, 20.0
  %v639 = vmin.f32 %v391, 20.0
  %v640 = vmin.f32 %v394, 20.0
  %v641 = vmin.f32 %v399, 20.0
  %v642 = vmin.f32 %v402, 20.0
  %v643 = vmin.f32 %v407, 20.0
  %v644 = vmin.f32 %v410, 20.0
  %v645 = vmin.f32 %v415, 20.0
  %v646 = vmin.f32 %v418, 20.0
  %v647 = vmin.f32 %v423, 20.0
  %v648 = vmin.f32 %v426, 20.0
  %v649 = vmin.f32 %v431, 20.0
  %v650 = vmin.f32 %v434, 20.0
  %v651 = vmin.f32 %v439, 20.0
  %v652 = vmin.f32 %v442, 20.0
  %v653 = vmin.f32 %v447, 20.0
  %v654 = vmin.f32 %v450, 20.0
  %v655 = vmin.f32 %v455, 20.0
  %v656 = vmin.f32 %v458, 20.0
  %v657 = vmin.f32 %v463, 20.0
  %v658 = vmin.f32 %v466, 20.0
  %v659 = vmin.f32 %v471, 20.0
  %v660 = vmin.f32 %v474, 20.0
  %v661 = vmin.f32 %v479, 20.0
  %v662 = vmin.f32 %v482, 20.0
  %v663 = vmin.f32 %v487, 20.0
  %v664 = vmin.f32 %v490, 20.0
  %v665 = vmin.f32 %v495, 20.0
  %v666 = vmin.f32 %v498, 20.0
  %v667 = vmin.f32 %v503, 20.0
  %v668 = vmin.f32 %v506, 20.0
  %v669 = vmin.f32 %v511, 20.0
  %v670 = vmin.f32 %v514, 20.0
  %v671 = vmin.f32 %v519, 20.0
  %v672 = vmin.f32 %v522, 20.0
  %v673 = vmin.f32 %v527, 20.0
  %v674 = vmin.f32 %v530, 20.0
  %v675 = vmin.f32 %v535, 20.0
  %v676 = vmin.f32 %v538, 20.0
  %v677 = vmin.f32 %v543, 20.0
  %v678 = vmin.f32 %v546, 20.0
  %v679 = vmin.f32 %v551, 20.0
  %v680 = vmin.f32 %v554, 20.0
  %v681 = vmin.f32 %v559, 20.0
  %v682 = vmin.f32 %v562, 20.0
  %v683 = vmin.f32 %v567, 20.0
  %v684 = vmin.f32 %v570, 20.0
  %v685 = vmin.f32 %v575, 20.0
  %v686 = vmin.f32 %v578, 20.0
  %v687 = vmin.f32 %v583, 20.0
  %v688 = vmin.f32 %v586, 20.0
  %v689 = vmin.f32 %v591, 20.0
  %v690 = vmin.f32 %v594, 20.0
  %v691 = vmin.f32 %v599, 20.0
  %v692 = vmin.f32 %v602, 20.0
  %v693 = vmin.f32 %v607, 20.0
  %v694 = vmin.f32 %v610, 20.0
  %v695 = vmin.f32 %v615, 20.0
  %v696 = vmin.f32 %v618, 20.0
  %v697 = vmin.f32 %v623, 20.0
  %v698 = vmin.f32 %v626, 20.0
  %v699 = vmin.f32 %v631, 20.0
  %v700 = vmin.f32 %v634, 20.0
  %v701 = vmul.f32 %v637, 1.442695
  %v702 = vpow.pop %v701
  %v703 = vmul.f32 %v638, 1.442695
  %v704 = vpow.pop %v703
  %v705 = vmul.f32 %v639, 1.442695
  %v706 = vpow.pop %v705
  %v707 = vmul.f32 %v640, 1.442695
  %v708 = vpow.pop %v707
  %v709 = vmul.f32 %v641, 1.442695
  %v710 = vpow.pop %v709
  %v711 = vmul.f32 %v642, 1.442695
  %v712 = vpow.pop %v711
  %v713 = vmul.f32 %v643, 1.442695
  %v714 = vpow.pop %v713
  %v715 = vmul.f32 %v644, 1.442695
  %v716 = vpow.pop %v715
  %v717 = vmul.f32 %v645, 1.442695
  %v718 = vpow.pop %v717
  %v719 = vmul.f32 %v646, 1.442695
  %v720 = vpow.pop %v719
  %v721 = vmul.f32 %v647, 1.442695
  %v722 = vpow.pop %v721
  %v723 = vmul.f32 %v648, 1.442695
  %v724 = vpow.pop %v723
  %v725 = vmul.f32 %v649, 1.442695
  %v726 = vpow.pop %v725
  %v727 = vmul.f32 %v650, 1.442695
  %v728 = vpow.pop %v727
  %v729 = vmul.f32 %v651, 1.442695
  %v730 = vpow.pop %v729
  %v731 = vmul.f32 %v652, 1.442695
  %v732 = vpow.pop %v731
  %v733 = vmul.f32 %v653, 1.442695
  %v734 = vpow.pop %v733
  %v735 = vmul.f32 %v654, 1.442695
  %v736 = vpow.pop %v735
  %v737 = vmul.f32 %v655, 1.442695
  %v738 = vpow.pop %v737
  %v739 = vmul.f32 %v656, 1.442695
  %v740 = vpow.pop %v739
  %v741 = vmul.f32 %v657, 1.442695
  %v742 = vpow.pop %v741
  %v743 = vmul.f32 %v658, 1.442695
  %v744 = vpow.pop %v743
  %v745 = vmul.f32 %v659, 1.442695
  %v746 = vpow.pop %v745
  %v747 = vmul.f32 %v660, 1.442695
  %v748 = vpow.pop %v747
  %v749 = vmul.f32 %v661, 1.442695
  %v750 = vpow.pop %v749
  %v751 = vmul.f32 %v662, 1.442695
  %v752 = vpow.pop %v751
  %v753 = vmul.f32 %v663, 1.442695
  %v754 = vpow.pop %v753
  %v755 = vmul.f32 %v664, 1.442695
  %v756 = vpow.pop %v755
  %v757 = vmul.f32 %v665, 1.442695
  %v758 = vpow.pop %v757
  %v759 = vmul.f32 %v666, 1.442695
  %v760 = vpow.pop %v759
  %v761 = vmul.f32 %v667, 1.442695
  %v762 = vpow.pop %v761
  %v763 = vmul.f32 %v668, 1.442695
  %v764 = vpow.pop %v763
  %v765 = vmul.f32 %v669, 1.442695
  %v766 = vpow.pop %v765
  %v767 = vmul.f32 %v670, 1.442695
  %v768 = vpow.pop %v767
  %v769 = vmul.f32 %v671, 1.442695
  %v770 = vpow.pop %v769
  %v771 = vmul.f32 %v672, 1.442695
  %v772 = vpow.pop %v771
  %v773 = vmul.f32 %v673, 1.442695
  %v774 = vpow.pop %v773
  %v775 = vmul.f32 %v674, 1.442695
  %v776 = vpow.pop %v775
  %v777 = vmul.f32 %v675, 1.442695
  %v778 = vpow.pop %v777
  %v779 = vmul.f32 %v676, 1.442695
  %v780 = vpow.pop %v779
  %v781 = vmul.f32 %v677, 1.442695
  %v782 = vpow.pop %v781
  %v783 = vmul.f32 %v678, 1.442695
  %v784 = vpow.pop %v783
  %v785 = vmul.f32 %v679, 1.442695
  %v786 = vpow.pop %v785
  %v787 = vmul.f32 %v680, 1.442695
  %v788 = vpow.pop %v787
  %v789 = vmul.f32 %v681, 1.442695
  %v790 = vpow.pop %v789
  %v791 = vmul.f32 %v682, 1.442695
  %v792 = vpow.pop %v791
  %v793 = vmul.f32 %v683, 1.442695
  %v794 = vpow.pop %v793
  %v795 = vmul.f32 %v684, 1.442695
  %v796 = vpow.pop %v795
  %v797 = vmul.f32 %v685, 1.442695
  %v798 = vpow.pop %v797
  %v799 = vmul.f32 %v686, 1.442695
  %v800 = vpow.pop %v799
  %v801 = vmul.f32 %v687, 1.442695
  %v802 = vpow.pop %v801
  %v803 = vmul.f32 %v688, 1.442695
  %v804 = vpow.pop %v803
  %v805 = vmul.f32 %v689, 1.442695
  %v806 = vpow.pop %v805
  %v807 = vmul.f32 %v690, 1.442695
  %v808 = vpow.pop %v807
  %v809 = vmul.f32 %v691, 1.442695
  %v810 = vpow.pop %v809
  %v811 = vmul.f32 %v692, 1.442695
  %v812 = vpow.pop %v811
  %v813 = vmul.f32 %v693, 1.442695
  %v814 = vpow.pop %v813
  %v815 = vmul.f32 %v694, 1.442695
  %v816 = vpow.pop %v815
  %v817 = vmul.f32 %v695, 1.442695
  %v818 = vpow.pop %v817
  %v819 = vmul.f32 %v696, 1.442695
  %v820 = vpow.pop %v819
  %v821 = vmul.f32 %v697, 1.442695
  %v822 = vpow.pop %v821
  %v823 = vmul.f32 %v698, 1.442695
  %v824 = vpow.pop %v823
  %v825 = vmul.f32 %v699, 1.442695
  %v826 = vpow.pop %v825
  %v827 = vmul.f32 %v700, 1.442695
  %v828 = vpow.pop %v827
  %v829 = vadd.f32 %v702, 1.0
  %v830 = vadd.f32 %v704, 1.0
  %v831 = vadd.f32 %v706, 1.0
  %v832 = vadd.f32 %v708, 1.0
  %v833 = vadd.f32 %v710, 1.0
  %v834 = vadd.f32 %v712, 1.0
  %v835 = vadd.f32 %v714, 1.0
  %v836 = vadd.f32 %v716, 1.0
  %v837 = vadd.f32 %v718, 1.0
  %v838 = vadd.f32 %v720, 1.0
  %v839 = vadd.f32 %v722, 1.0
  %v840 = vadd.f32 %v724, 1.0
  %v841 = vadd.f32 %v726, 1.0
  %v842 = vadd.f32 %v728, 1.0
  %v843 = vadd.f32 %v730, 1.0
  %v844 = vadd.f32 %v732, 1.0
  %v845 = vadd.f32 %v734, 1.0
  %v846 = vadd.f32 %v736, 1.0
  %v847 = vadd.f32 %v738, 1.0
  %v848 = vadd.f32 %v740, 1.0
  %v849 = vadd.f32 %v742, 1.0
  %v850 = vadd.f32 %v744, 1.0
  %v851 = vadd.f32 %v746, 1.0
  %v852 = vadd.f32 %v748, 1.0
  %v853 = vadd.f32 %v750, 1.0
  %v854 = vadd.f32 %v752, 1.0
  %v855 = vadd.f32 %v754, 1.0
  %v856 = vadd.f32 %v756, 1.0
  %v857 = vadd.f32 %v758, 1.0
  %v858 = vadd.f32 %v760, 1.0
  %v859 = vadd.f32 %v762, 1.0
  %v860 = vadd.f32 %v764, 1.0
  %v861 = vadd.f32 %v766, 1.0
  %v862 = vadd.f32 %v768, 1.0
  %v863 = vadd.f32 %v770, 1.0
  %v864 = vadd.f32 %v772, 1.0
  %v865 = vadd.f32 %v774, 1.0
  %v866 = vadd.f32 %v776, 1.0
  %v867 = vadd.f32 %v778, 1.0
  %v868 = vadd.f32 %v780, 1.0
  %v869 = vadd.f32 %v782, 1.0
  %v870 = vadd.f32 %v784, 1.0
  %v871 = vadd.f32 %v786, 1.0
  %v872 = vadd.f32 %v788, 1.0
  %v873 = vadd.f32 %v790, 1.0
  %v874 = vadd.f32 %v792, 1.0
  %v875 = vadd.f32 %v794, 1.0
  %v876 = vadd.f32 %v796, 1.0
  %v877 = vadd.f32 %v798, 1.0
  %v878 = vadd.f32 %v800, 1.0
  %v879 = vadd.f32 %v802, 1.0
  %v880 = vadd.f32 %v804, 1.0
  %v881 = vadd.f32 %v806, 1.0
  %v882 = vadd.f32 %v808, 1.0
  %v883 = vadd.f32 %v810, 1.0
  %v884 = vadd.f32 %v812, 1.0
  %v885 = vadd.f32 %v814, 1.0
  %v886 = vadd.f32 %v816, 1.0
  %v887 = vadd.f32 %v818, 1.0
  %v888 = vadd.f32 %v820, 1.0
  %v889 = vadd.f32 %v822, 1.0
  %v890 = vadd.f32 %v824, 1.0
  %v891 = vadd.f32 %v826, 1.0
  %v892 = vadd.f32 %v828, 1.0
  %v893 = vmul.f32 %v829, %v829
  %v894 = vmul.f32 %v830, %v830
  %v895 = vmul.f32 %v831, %v831
  %v896 = vmul.f32 %v832, %v832
  %v897 = vmul.f32 %v833, %v833
  %v898 = vmul.f32 %v834, %v834
  %v899 = vmul.f32 %v835, %v835
  %v900 = vmul.f32 %v836, %v836
  %v901 = vmul.f32 %v837, %v837
  %v902 = vmul.f32 %v838, %v838
  %v903 = vmul.f32 %v839, %v839
  %v904 = vmul.f32 %v840, %v840
  %v905 = vmul.f32 %v841, %v841
  %v906 = vmul.f32 %v842, %v842
  %v907 = vmul.f32 %v843, %v843
  %v908 = vmul.f32 %v844, %v844
  %v909 = vmul.f32 %v845, %v845
  %v910 = vmul.f32 %v846, %v846
  %v911 = vmul.f32 %v847, %v847
  %v912 = vmul.f32 %v848, %v848
  %v913 = vmul.f32 %v849, %v849
  %v914 = vmul.f32 %v850, %v850
  %v915 = vmul.f32 %v851, %v851
  %v916 = vmul.f32 %v852, %v852
  %v917 = vmul.f32 %v853, %v853
  %v918 = vmul.f32 %v854, %v854
  %v919 = vmul.f32 %v855, %v855
  %v920 = vmul.f32 %v856, %v856
  %v921 = vmul.f32 %v857, %v857
  %v922 = vmul.f32 %v858, %v858
  %v923 = vmul.f32 %v859, %v859
  %v924 = vmul.f32 %v860, %v860
  %v925 = vmul.f32 %v861, %v861
  %v926 = vmul.f32 %v862, %v862
  %v927 = vmul.f32 %v863, %v863
  %v928 = vmul.f32 %v864, %v864
  %v929 = vmul.f32 %v865, %v865
  %v930 = vmul.f32 %v866, %v866
  %v931 = vmul.f32 %v867, %v867
  %v932 = vmul.f32 %v868, %v868
  %v933 = vmul.f32 %v869, %v869
  %v934 = vmul.f32 %v870, %v870
  %v935 = vmul.f32 %v871, %v871
  %v936 = vmul.f32 %v872, %v872
  %v937 = vmul.f32 %v873, %v873
  %v938 = vmul.f32 %v874, %v874
  %v939 = vmul.f32 %v875, %v875
  %v940 = vmul.f32 %v876, %v876
  %v941 = vmul.f32 %v877, %v877
  %v942 = vmul.f32 %v878, %v878
  %v943 = vmul.f32 %v879, %v879
  %v944 = vmul.f32 %v880, %v880
  %v945 = vmul.f32 %v881, %v881
  %v946 = vmul.f32 %v882, %v882
  %v947 = vmul.f32 %v883, %v883
  %v948 = vmul.f32 %v884, %v884
  %v949 = vmul.f32 %v885, %v885
  %v950 = vmul.f32 %v886, %v886
  %v951 = vmul.f32 %v887, %v887
  %v952 = vmul.f32 %v888, %v888
  %v953 = vmul.f32 %v889, %v889
  %v954 = vmul.f32 %v890, %v890
  %v955 = vmul.f32 %v891, %v891
  %v956 = vmul.f32 %v892, %v892
  %v957 = vsub.f32 %v893, 1.0
  %v958 = vsub.f32 %v894, 1.0
  %v959 = vsub.f32 %v895, 1.0
  %v960 = vsub.f32 %v896, 1.0
  %v961 = vsub.f32 %v897, 1.0
  %v962 = vsub.f32 %v898, 1.0
  %v963 = vsub.f32 %v899, 1.0
  %v964 = vsub.f32 %v900, 1.0
  %v965 = vsub.f32 %v901, 1.0
  %v966 = vsub.f32 %v902, 1.0
  %v967 = vsub.f32 %v903, 1.0
  %v968 = vsub.f32 %v904, 1.0
  %v969 = vsub.f32 %v905, 1.0
  %v970 = vsub.f32 %v906, 1.0
  %v971 = vsub.f32 %v907, 1.0
  %v972 = vsub.f32 %v908, 1.0
  %v973 = vsub.f32 %v909, 1.0
  %v974 = vsub.f32 %v910, 1.0
  %v975 = vsub.f32 %v911, 1.0
  %v976 = vsub.f32 %v912, 1.0
  %v977 = vsub.f32 %v913, 1.0
  %v978 = vsub.f32 %v914, 1.0
  %v979 = vsub.f32 %v915, 1.0
  %v980 = vsub.f32 %v916, 1.0
  %v981 = vsub.f32 %v917, 1.0
  %v982 = vsub.f32 %v918, 1.0
  %v983 = vsub.f32 %v919, 1.0
  %v984 = vsub.f32 %v920, 1.0
  %v985 = vsub.f32 %v921, 1.0
  %v986 = vsub.f32 %v922, 1.0
  %v987 = vsub.f32 %v923, 1.0
  %v988 = vsub.f32 %v924, 1.0
  %v989 = vsub.f32 %v925, 1.0
  %v990 = vsub.f32 %v926, 1.0
  %v991 = vsub.f32 %v927, 1.0
  %v992 = vsub.f32 %v928, 1.0
  %v993 = vsub.f32 %v929, 1.0
  %v994 = vsub.f32 %v930, 1.0
  %v995 = vsub.f32 %v931, 1.0
  %v996 = vsub.f32 %v932, 1.0
  %v997 = vsub.f32 %v933, 1.0
  %v998 = vsub.f32 %v934, 1.0
  %v999 = vsub.f32 %v935, 1.0
  %v1000 = vsub.f32 %v936, 1.0
  %v1001 = vsub.f32 %v937, 1.0
  %v1002 = vsub.f32 %v938, 1.0
  %v1003 = vsub.f32 %v939, 1.0
  %v1004 = vsub.f32 %v940, 1.0
  %v1005 = vsub.f32 %v941, 1.0
  %v1006 = vsub.f32 %v942, 1.0
  %v1007 = vsub.f32 %v943, 1.0
  %v1008 = vsub.f32 %v944, 1.0
  %v1009 = vsub.f32 %v945, 1.0
  %v1010 = vsub.f32 %v946, 1.0
  %v1011 = vsub.f32 %v947, 1.0
  %v1012 = vsub.f32 %v948, 1.0
  %v1013 = vsub.f32 %v949, 1.0
  %v1014 = vsub.f32 %v950, 1.0
  %v1015 = vsub.f32 %v951, 1.0
  %v1016 = vsub.f32 %v952, 1.0
  %v1017 = vsub.f32 %v953, 1.0
  %v1018 = vsub.f32 %v954, 1.0
  %v1019 = vsub.f32 %v955, 1.0
  %v1020 = vsub.f32 %v956, 1.0
  %v1021 = vmul.f32 %v383, %v957
  %v1022 = vmul.f32 %v386, %v958
  %v1023 = vmul.f32 %v391, %v959
  %v1024 = vmul.f32 %v394, %v960
  %v1025 = vmul.f32 %v399, %v961
  %v1026 = vmul.f32 %v402, %v962
  %v1027 = vmul.f32 %v407, %v963
  %v1028 = vmul.f32 %v410, %v964
  %v1029 = vmul.f32 %v415, %v965
  %v1030 = vmul.f32 %v418, %v966
  %v1031 = vmul.f32 %v423, %v967
  %v1032 = vmul.f32 %v426, %v968
  %v1033 = vmul.f32 %v431, %v969
  %v1034 = vmul.f32 %v434, %v970
  %v1035 = vmul.f32 %v439, %v971
  %v1036 = vmul.f32 %v442, %v972
  %v1037 = vmul.f32 %v447, %v973
  %v1038 = vmul.f32 %v450, %v974
  %v1039 = vmul.f32 %v455, %v975
  %v1040 = vmul.f32 %v458, %v976
  %v1041 = vmul.f32 %v463, %v977
  %v1042 = vmul.f32 %v466, %v978
  %v1043 = vmul.f32 %v471, %v979
  %v1044 = vmul.f32 %v474, %v980
  %v1045 = vmul.f32 %v479, %v981
  %v1046 = vmul.f32 %v482, %v982
  %v1047 = vmul.f32 %v487, %v983
  %v1048 = vmul.f32 %v490, %v984
  %v1049 = vmul.f32 %v495, %v985
  %v1050 = vmul.f32 %v498, %v986
  %v1051 = vmul.f32 %v503, %v987
  %v1052 = vmul.f32 %v506, %v988
  %v1053 = vmul.f32 %v511, %v989
  %v1054 = vmul.f32 %v514, %v990
  %v1055 = vmul.f32 %v519, %v991
  %v1056 = vmul.f32 %v522, %v992
  %v1057 = vmul.f32 %v527, %v993
  %v1058 = vmul.f32 %v530, %v994
  %v1059 = vmul.f32 %v535, %v995
  %v1060 = vmul.f32 %v538, %v996
  %v1061 = vmul.f32 %v543, %v997
  %v1062 = vmul.f32 %v546, %v998
  %v1063 = vmul.f32 %v551, %v999
  %v1064 = vmul.f32 %v554, %v1000
  %v1065 = vmul.f32 %v559, %v1001
  %v1066 = vmul.f32 %v562, %v1002
  %v1067 = vmul.f32 %v567, %v1003
  %v1068 = vmul.f32 %v570, %v1004
  %v1069 = vmul.f32 %v575, %v1005
  %v1070 = vmul.f32 %v578, %v1006
  %v1071 = vmul.f32 %v583, %v1007
  %v1072 = vmul.f32 %v586, %v1008
  %v1073 = vmul.f32 %v591, %v1009
  %v1074 = vmul.f32 %v594, %v1010
  %v1075 = vmul.f32 %v599, %v1011
  %v1076 = vmul.f32 %v602, %v1012
  %v1077 = vmul.f32 %v607, %v1013
  %v1078 = vmul.f32 %v610, %v1014
  %v1079 = vmul.f32 %v615, %v1015
  %v1080 = vmul.f32 %v618, %v1016
  %v1081 = vmul.f32 %v623, %v1017
  %v1082 = vmul.f32 %v626, %v1018
  %v1083 = vmul.f32 %v631, %v1019
  %v1084 = vmul.f32 %v634, %v1020
  %v1085 = vadd.f32 %v893, 1.0
  %v1086 = vadd.f32 %v894, 1.0
  %v1087 = vadd.f32 %v895, 1.0
  %v1088 = vadd.f32 %v896, 1.0
  %v1089 = vadd.f32 %v897, 1.0
  %v1090 = vadd.f32 %v898, 1.0
  %v1091 = vadd.f32 %v899, 1.0
  %v1092 = vadd.f32 %v900, 1.0
  %v1093 = vadd.f32 %v901, 1.0
  %v1094 = vadd.f32 %v902, 1.0
  %v1095 = vadd.f32 %v903, 1.0
  %v1096 = vadd.f32 %v904, 1.0
  %v1097 = vadd.f32 %v905, 1.0
  %v1098 = vadd.f32 %v906, 1.0
  %v1099 = vadd.f32 %v907, 1.0
  %v1100 = vadd.f32 %v908, 1.0
  %v1101 = vadd.f32 %v909, 1.0
  %v1102 = vadd.f32 %v910, 1.0
  %v1103 = vadd.f32 %v911, 1.0
  %v1104 = vadd.f32 %v912, 1.0
  %v1105 = vadd.f32 %v913, 1.0
  %v1106 = vadd.f32 %v914, 1.0
  %v1107 = vadd.f32 %v915, 1.0
  %v1108 = vadd.f32 %v916, 1.0
  %v1109 = vadd.f32 %v917, 1.0
  %v1110 = vadd.f32 %v918, 1.0
  %v1111 = vadd.f32 %v919, 1.0
  %v1112 = vadd.f32 %v920, 1.0
  %v1113 = vadd.f32 %v921, 1.0
  %v1114 = vadd.f32 %v922, 1.0
  %v1115 = vadd.f32 %v923, 1.0
  %v1116 = vadd.f32 %v924, 1.0
  %v1117 = vadd.f32 %v925, 1.0
  %v1118 = vadd.f32 %v926, 1.0
  %v1119 = vadd.f32 %v927, 1.0
  %v1120 = vadd.f32 %v928, 1.0
  %v1121 = vadd.f32 %v929, 1.0
  %v1122 = vadd.f32 %v930, 1.0
  %v1123 = vadd.f32 %v931, 1.0
  %v1124 = vadd.f32 %v932, 1.0
  %v1125 = vadd.f32 %v933, 1.0
  %v1126 = vadd.f32 %v934, 1.0
  %v1127 = vadd.f32 %v935, 1.0
  %v1128 = vadd.f32 %v936, 1.0
  %v1129 = vadd.f32 %v937, 1.0
  %v1130 = vadd.f32 %v938, 1.0
  %v1131 = vadd.f32 %v939, 1.0
  %v1132 = vadd.f32 %v940, 1.0
  %v1133 = vadd.f32 %v941, 1.0
  %v1134 = vadd.f32 %v942, 1.0
  %v1135 = vadd.f32 %v943, 1.0
  %v1136 = vadd.f32 %v944, 1.0
  %v1137 = vadd.f32 %v945, 1.0
  %v1138 = vadd.f32 %v946, 1.0
  %v1139 = vadd.f32 %v947, 1.0
  %v1140 = vadd.f32 %v948, 1.0
  %v1141 = vadd.f32 %v949, 1.0
  %v1142 = vadd.f32 %v950, 1.0
  %v1143 = vadd.f32 %v951, 1.0
  %v1144 = vadd.f32 %v952, 1.0
  %v1145 = vadd.f32 %v953, 1.0
  %v1146 = vadd.f32 %v954, 1.0
  %v1147 = vadd.f32 %v955, 1.0
  %v1148 = vadd.f32 %v956, 1.0
  %v1149 = vrcp.pop %v1085
  %v1150 = vrcp.pop %v1086
  %v1151 = vrcp.pop %v1087
  %v1152 = vrcp.pop %v1088
  %v1153 = vrcp.pop %v1089
  %v1154 = vrcp.pop %v1090
  %v1155 = vrcp.pop %v1091
  %v1156 = vrcp.pop %v1092
  %v1157 = vrcp.pop %v1093
  %v1158 = vrcp.pop %v1094
  %v1159 = vrcp.pop %v1095
  %v1160 = vrcp.pop %v1096
  %v1161 = vrcp.pop %v1097
  %v1162 = vrcp.pop %v1098
  %v1163 = vrcp.pop %v1099
  %v1164 = vrcp.pop %v1100
  %v1165 = vrcp.pop %v1101
  %v1166 = vrcp.pop %v1102
  %v1167 = vrcp.pop %v1103
  %v1168 = vrcp.pop %v1104
  %v1169 = vrcp.pop %v1105
  %v1170 = vrcp.pop %v1106
  %v1171 = vrcp.pop %v1107
  %v1172 = vrcp.pop %v1108
  %v1173 = vrcp.pop %v1109
  %v1174 = vrcp.pop %v1110
  %v1175 = vrcp.pop %v1111
  %v1176 = vrcp.pop %v1112
  %v1177 = vrcp.pop %v1113
  %v1178 = vrcp.pop %v1114
  %v1179 = vrcp.pop %v1115
  %v1180 = vrcp.pop %v1116
  %v1181 = vrcp.pop %v1117
  %v1182 = vrcp.pop %v1118
  %v1183 = vrcp.pop %v1119
  %v1184 = vrcp.pop %v1120
  %v1185 = vrcp.pop %v1121
  %v1186 = vrcp.pop %v1122
  %v1187 = vrcp.pop %v1123
  %v1188 = vrcp.pop %v1124
  %v1189 = vrcp.pop %v1125
  %v1190 = vrcp.pop %v1126
  %v1191 = vrcp.pop %v1127
  %v1192 = vrcp.pop %v1128
  %v1193 = vrcp.pop %v1129
  %v1194 = vrcp.pop %v1130
  %v1195 = vrcp.pop %v1131
  %v1196 = vrcp.pop %v1132
  %v1197 = vrcp.pop %v1133
  %v1198 = vrcp.pop %v1134
  %v1199 = vrcp.pop %v1135
  %v1200 = vrcp.pop %v1136
  %v1201 = vrcp.pop %v1137
  %v1202 = vrcp.pop %v1138
  %v1203 = vrcp.pop %v1139
  %v1204 = vrcp.pop %v1140
  %v1205 = vrcp.pop %v1141
  %v1206 = vrcp.pop %v1142
  %v1207 = vrcp.pop %v1143
  %v1208 = vrcp.pop %v1144
  %v1209 = vrcp.pop %v1145
  %v1210 = vrcp.pop %v1146
  %v1211 = vrcp.pop %v1147
  %v1212 = vrcp.pop %v1148
  %v1213 = vmul.f32 %v1021, %v1149
  %v1214 = vmul.f32 %v1022, %v1150
  %v1215 = vmul.f32 %v1023, %v1151
  %v1216 = vmul.f32 %v1024, %v1152
  %v1217 = vmul.f32 %v1025, %v1153
  %v1218 = vmul.f32 %v1026, %v1154
  %v1219 = vmul.f32 %v1027, %v1155
  %v1220 = vmul.f32 %v1028, %v1156
  %v1221 = vmul.f32 %v1029, %v1157
  %v1222 = vmul.f32 %v1030, %v1158
  %v1223 = vmul.f32 %v1031, %v1159
  %v1224 = vmul.f32 %v1032, %v1160
  %v1225 = vmul.f32 %v1033, %v1161
  %v1226 = vmul.f32 %v1034, %v1162
  %v1227 = vmul.f32 %v1035, %v1163
  %v1228 = vmul.f32 %v1036, %v1164
  %v1229 = vmul.f32 %v1037, %v1165
  %v1230 = vmul.f32 %v1038, %v1166
  %v1231 = vmul.f32 %v1039, %v1167
  %v1232 = vmul.f32 %v1040, %v1168
  %v1233 = vmul.f32 %v1041, %v1169
  %v1234 = vmul.f32 %v1042, %v1170
  %v1235 = vmul.f32 %v1043, %v1171
  %v1236 = vmul.f32 %v1044, %v1172
  %v1237 = vmul.f32 %v1045, %v1173
  %v1238 = vmul.f32 %v1046, %v1174
  %v1239 = vmul.f32 %v1047, %v1175
  %v1240 = vmul.f32 %v1048, %v1176
  %v1241 = vmul.f32 %v1049, %v1177
  %v1242 = vmul.f32 %v1050, %v1178
  %v1243 = vmul.f32 %v1051, %v1179
  %v1244 = vmul.f32 %v1052, %v1180
  %v1245 = vmul.f32 %v1053, %v1181
  %v1246 = vmul.f32 %v1054, %v1182
  %v1247 = vmul.f32 %v1055, %v1183
  %v1248 = vmul.f32 %v1056, %v1184
  %v1249 = vmul.f32 %v1057, %v1185
  %v1250 = vmul.f32 %v1058, %v1186
  %v1251 = vmul.f32 %v1059, %v1187
  %v1252 = vmul.f32 %v1060, %v1188
  %v1253 = vmul.f32 %v1061, %v1189
  %v1254 = vmul.f32 %v1062, %v1190
  %v1255 = vmul.f32 %v1063, %v1191
  %v1256 = vmul.f32 %v1064, %v1192
  %v1257 = vmul.f32 %v1065, %v1193
  %v1258 = vmul.f32 %v1066, %v1194
  %v1259 = vmul.f32 %v1067, %v1195
  %v1260 = vmul.f32 %v1068, %v1196
  %v1261 = vmul.f32 %v1069, %v1197
  %v1262 = vmul.f32 %v1070, %v1198
  %v1263 = vmul.f32 %v1071, %v1199
  %v1264 = vmul.f32 %v1072, %v1200
  %v1265 = vmul.f32 %v1073, %v1201
  %v1266 = vmul.f32 %v1074, %v1202
  %v1267 = vmul.f32 %v1075, %v1203
  %v1268 = vmul.f32 %v1076, %v1204
  %v1269 = vmul.f32 %v1077, %v1205
  %v1270 = vmul.f32 %v1078, %v1206
  %v1271 = vmul.f32 %v1079, %v1207
  %v1272 = vmul.f32 %v1080, %v1208
  %v1273 = vmul.f32 %v1081, %v1209
  %v1274 = vmul.f32 %v1082, %v1210
  %v1275 = vmul.f32 %v1083, %v1211
  %v1276 = vmul.f32 %v1084, %v1212
  %1277 = vst [vmem:[%s3] sm:$0xff] %v1213
  %1278 = vst [vmem:[%s3 + $0x8] sm:$0xff] %v1214
  %1279 = vst [vmem:[%s3 + $0x10] sm:$0xff] %v1215
  %1280 = vst [vmem:[%s3 + $0x18] sm:$0xff] %v1216
  %1281 = vst [vmem:[%s3 + $0x20] sm:$0xff] %v1217
  %1282 = vst [vmem:[%s3 + $0x28] sm:$0xff] %v1218
  %1283 = vst [vmem:[%s3 + $0x30] sm:$0xff] %v1219
  %1284 = vst [vmem:[%s3 + $0x38] sm:$0xff] %v1220
  %1285 = vst [vmem:[%s3 + $0x40] sm:$0xff] %v1221
  %1286 = vst [vmem:[%s3 + $0x48] sm:$0xff] %v1222
  %1287 = vst [vmem:[%s3 + $0x50] sm:$0xff] %v1223
  %1288 = vst [vmem:[%s3 + $0x58] sm:$0xff] %v1224
  %1289 = vst [vmem:[%s3 + $0x60] sm:$0xff] %v1225
  %1290 = vst [vmem:[%s3 + $0x68] sm:$0xff] %v1226
  %1291 = vst [vmem:[%s3 + $0x70] sm:$0xff] %v1227
  %1292 = vst [vmem:[%s3 + $0x78] sm:$0xff] %v1228
  %1293 = vst [vmem:[%s3 + $0x80] sm:$0xff] %v1229
  %1294 = vst [vmem:[%s3 + $0x88] sm:$0xff] %v1230
  %1295 = vst [vmem:[%s3 + $0x90] sm:$0xff] %v1231
  %1296 = vst [vmem:[%s3 + $0x98] sm:$0xff] %v1232
  %1297 = vst [vmem:[%s3 + $0xa0] sm:$0xff] %v1233
  %1298 = vst [vmem:[%s3 + $0xa8] sm:$0xff] %v1234
  %1299 = vst [vmem:[%s3 + $0xb0] sm:$0xff] %v1235
  %1300 = vst [vmem:[%s3 + $0xb8] sm:$0xff] %v1236
  %1301 = vst [vmem:[%s3 + $0xc0] sm:$0xff] %v1237
  %1302 = vst [vmem:[%s3 + $0xc8] sm:$0xff] %v1238
  %1303 = vst [vmem:[%s3 + $0xd0] sm:$0xff] %v1239
  %1304 = vst [vmem:[%s3 + $0xd8] sm:$0xff] %v1240
  %1305 = vst [vmem:[%s3 + $0xe0] sm:$0xff] %v1241
  %1306 = vst [vmem:[%s3 + $0xe8] sm:$0xff] %v1242
  %1307 = vst [vmem:[%s3 + $0xf0] sm:$0xff] %v1243
  %1308 = vst [vmem:[%s3 + $0xf8] sm:$0xff] %v1244
  %1309 = vst [vmem:[%s3 + $0x100] sm:$0xff] %v1245
  %1310 = vst [vmem:[%s3 + $0x108] sm:$0xff] %v1246
  %1311 = vst [vmem:[%s3 + $0x110] sm:$0xff] %v1247
  %1312 = vst [vmem:[%s3 + $0x118] sm:$0xff] %v1248
  %1313 = vst [vmem:[%s3 + $0x120] sm:$0xff] %v1249
  %1314 = vst [vmem:[%s3 + $0x128] sm:$0xff] %v1250
  %1315 = vst [vmem:[%s3 + $0x130] sm:$0xff] %v1251
  %1316 = vst [vmem:[%s3 + $0x138] sm:$0xff] %v1252
  %1317 = vst [vmem:[%s3 + $0x140] sm:$0xff] %v1253
  %1318 = vst [vmem:[%s3 + $0x148] sm:$0xff] %v1254
  %1319 = vst [vmem:[%s3 + $0x150] sm:$0xff] %v1255
  %1320 = vst [vmem:[%s3 + $0x158] sm:$0xff] %v1256
  %1321 = vst [vmem:[%s3 + $0x160] sm:$0xff] %v1257
  %1322 = vst [vmem:[%s3 + $0x168] sm:$0xff] %v1258
  %1323 = vst [vmem:[%s3 + $0x170] sm:$0xff] %v1259
  %1324 = vst [vmem:[%s3 + $0x178] sm:$0xff] %v1260
  %1325 = vst [vmem:[%s3 + $0x180] sm:$0xff] %v1261
  %1326 = vst [vmem:[%s3 + $0x188] sm:$0xff] %v1262
  %1327 = vst [vmem:[%s3 + $0x190] sm:$0xff] %v1263
  %1328 = vst [vmem:[%s3 + $0x198] sm:$0xff] %v1264
  %1329 = vst [vmem:[%s3 + $0x1a0] sm:$0xff] %v1265
  %1330 = vst [vmem:[%s3 + $0x1a8] sm:$0xff] %v1266
  %1331 = vst [vmem:[%s3 + $0x1b0] sm:$0xff] %v1267
  %1332 = vst [vmem:[%s3 + $0x1b8] sm:$0xff] %v1268
  %1333 = vst [vmem:[%s3 + $0x1c0] sm:$0xff] %v1269
  %1334 = vst [vmem:[%s3 + $0x1c8] sm:$0xff] %v1270
  %1335 = vst [vmem:[%s3 + $0x1d0] sm:$0xff] %v1271
  %1336 = vst [vmem:[%s3 + $0x1d8] sm:$0xff] %v1272
  %1337 = vst [vmem:[%s3 + $0x1e0] sm:$0xff] %v1273
  %1338 = vst [vmem:[%s3 + $0x1e8] sm:$0xff] %v1274
  %1339 = vst [vmem:[%s3 + $0x1f0] sm:$0xff] %v1275
  %1340 = vst [vmem:[%s3 + $0x1f8] sm:$0xff] %v1276
  // Predicated region
  $region14: #{route_module_forward.1} parent=0 // pred_check
    _
  $region15: #{route_module_forward.1} parent=0 // pred_check_branch
    %1342 = sbr.rel (0) target = $region17
  $region16: #{route_module_forward.1} parent=0 // pred_region
    _
  $region17: #{route_module_forward.1} parent=0 // pred_fallthru
    _
  // Predicated region
  $region18: #{route_module_forward.1} parent=0 // pred_check
    _
  $region19: #{route_module_forward.1} parent=0 // pred_check_branch
    %1344 = sbr.rel (0) target = $region21
  $region20: #{route_module_forward.1} parent=0 // pred_region
    _
  $region21: #{route_module_forward.1} parent=0 // pred_fallthru
    _

</llo_original>
